<compile_context>
chip_gen: v7x
topology: tpu7x:2x2x1
jax: 0.10.0
libtpu: 0.0.40
codegen_flags: <defaults>
</compile_context>

<pallas_src>
import jax
import jax.numpy as jnp
from jax.experimental import pallas as pl
from jax.experimental.pallas import tpu as pltpu


def _round_up(x, m):
    return ((x + m - 1) // m) * m


def _pad_value(dtype):
    dtype = jnp.dtype(dtype)
    if jnp.issubdtype(dtype, jnp.floating):
        return -jnp.inf
    if jnp.issubdtype(dtype, jnp.integer):
        return int(jnp.iinfo(dtype).min)
    raise TypeError(f"unsupported dtype for max pooling: {dtype}")


def pool1max_kernel(x_ref, o_ref):
    """Running max over L tiles for one block of flattened (B*C) rows.

    x_ref: (Rt, tl)  one tile of the flattened [B*C, L] input
    o_ref: (Rt, 1)   output block, VMEM-resident across the L grid axis
    """
    l_idx = pl.program_id(1)
    # Lane-axis reduce; result layout already matches the output block, so the
    # steady-state loop is DMA + one reduce + one VPU max (no relayout).
    tile_max = jnp.max(x_ref[...], axis=-1, keepdims=True)

    @pl.when(l_idx == 0)
    def _init():
        o_ref[...] = tile_max

    @pl.when(l_idx != 0)
    def _accumulate():
        o_ref[...] = jnp.maximum(o_ref[...], tile_max)


def pool1_max(x, *, block_bytes=2 * 1024 * 1024, min_pallas_bytes=1 << 20,
              force_pallas=False):
    """F.max_pool1d(x, kernel_size=x.shape[2]) -> [B, C, 1]."""
    B, C, L = x.shape
    itemsize = jnp.dtype(x.dtype).itemsize

    # Tiny-input fast path: fixed pallas_call overhead dwarfs the actual work.
    if not force_pallas and B * C * L * itemsize < min_pallas_bytes:
        return jnp.max(x, axis=2, keepdims=True)

    # Flatten to (rows, L); rows = B*C. Contiguous, so this reshape is free.
    R = B * C
    x_flat = x.reshape(R, L)

    # --- row-block size Rt (multiple of the sublane packing, kept modest) ---
    row_align = max(8, 32 // itemsize)      # 8 f32, 16 bf16, 32 int8
    R_pad = _round_up(R, row_align)
    Rt = min(R_pad, 256)                    # keep running-max column in few vregs
    if pl.cdiv(R_pad, Rt) < 2 and R_pad > row_align:
        # Guarantee >=2 row blocks so both v7x TensorCores get work.
        Rt = _round_up(pl.cdiv(R_pad, 2), row_align)
    n_r = pl.cdiv(R_pad, Rt)
    R_pad = n_r * Rt

    # --- L tile from a byte budget (~block_bytes per input block) -----------
    tl = max(128, (block_bytes // (Rt * itemsize)) // 128 * 128)
    tl = min(tl, _round_up(L, 128))
    n_l = pl.cdiv(L, tl)
    L_pad = n_l * tl

    # --- pad with the dtype minimum so padded elements never win the max ----
    if R_pad != R or L_pad != L:
        x_flat = jnp.pad(
            x_flat, ((0, R_pad - R), (0, L_pad - L)),
            constant_values=_pad_value(x.dtype))

    out = pl.pallas_call(
        pool1max_kernel,
        out_shape=jax.ShapeDtypeStruct((R_pad, 1), x.dtype),
        grid_spec=pltpu.PrefetchScalarGridSpec(
            num_scalar_prefetch=0,
            grid=(n_r, n_l),                              # reduction axis last
            in_specs=[pl.BlockSpec((Rt, tl), lambda r, l: (r, l))],
            out_specs=pl.BlockSpec((Rt, 1), lambda r, l: (r, 0)),
        ),
        compiler_params=pltpu.CompilerParams(
            dimension_semantics=("parallel", "arbitrary"),
        ),
    )(x_flat)

    # Drop padded rows and restore the PyTorch max_pool1d shape [B, C, 1].
    return out[:R].reshape(B, C, 1)


def _reference(x):
    return jnp.max(x, axis=2, keepdims=True)


if __name__ == "__main__":
    key = jax.random.PRNGKey(0)
    k1, k2 = jax.random.split(key)

    # Small case matching the module's implied shapes [B, C, L]; forced through
    # the Pallas path so the kernel (incl. row/lane padding) is exercised.
    B, C, L = 2, 8, 16
    x = jax.random.normal(k1, (B, C, L), dtype=jnp.float32)
    out = jax.block_until_ready(pool1_max(x, force_pallas=True))
    assert out.shape == (B, C, 1)
    assert jnp.allclose(out, _reference(x))

    # Default call on the same tiny input takes the XLA fast path.
    out_fast = jax.block_until_ready(pool1_max(x))
    assert out_fast.shape == (B, C, 1)
    assert jnp.allclose(out_fast, _reference(x))

    # Larger case exercising multiple row blocks and a multi-tile L reduction
    # (grid = (2 row blocks, 4 L tiles) with the reduced block_bytes budget).
    x2 = jax.random.normal(k2, (2, 16, 4096), dtype=jnp.float32)
    out2 = jax.block_until_ready(
        pool1_max(x2, force_pallas=True, block_bytes=64 * 1024))
    assert out2.shape == (2, 16, 1)
    assert jnp.allclose(out2, _reference(x2))

    print("KERNEL_OK")
</pallas_src>

<mosaic_0001>
module attributes {stable_mosaic.version = 11 : i64} {
  func.func @pool1max_kernel(%arg0: i32, %arg1: i32, %arg2: memref<8x128xf32, #tpu.memory_space<vmem>>, %arg3: memref<8x1xf32, #tpu.memory_space<vmem>>) attributes {dimension_semantics = [#tpu.dimension_semantics<parallel>, #tpu.dimension_semantics<arbitrary>], iteration_bounds = array<i64: 2, 1>, scalar_prefetch = 0 : i64, scratch_operands = 0 : i64, tpu.core_type = #tpu.core_type<tc>, window_params = [{transform_indices = @transform_0, window_bounds = array<i64: 8, 128>}, {transform_indices = @transform_1, window_bounds = array<i64: 8, 1>}]} {
    %c0 = arith.constant 0 : index
    %c0_0 = arith.constant 0 : index
    %0 = vector.load %arg2[%c0, %c0_0] : memref<8x128xf32, #tpu.memory_space<vmem>>, vector<8x128xf32>
    %cst = arith.constant dense<0xFF800000> : vector<8xf32>
    %1 = vector.multi_reduction <maximumf>, %0, %cst [1] : vector<8x128xf32> to vector<8xf32>
    %2 = vector.shape_cast %1 : vector<8xf32> to vector<8x1xf32>
    %c0_i32 = arith.constant 0 : i32
    %3 = arith.cmpi eq, %arg1, %c0_i32 : i32
    %4 = arith.extui %3 : i1 to i32
    %c0_i32_1 = arith.constant 0 : i32
    %5 = arith.cmpi ne, %4, %c0_i32_1 : i32
    scf.if %5 {
      %c0_4 = arith.constant 0 : index
      %c0_5 = arith.constant 0 : index
      %9 = vector.load %arg3[%c0_4, %c0_5] : memref<8x1xf32, #tpu.memory_space<vmem>>, vector<8x1xf32>
      tpu.vector_store %arg3[%c0_4, %c0_5], %2 {strides = array<i32>} : memref<8x1xf32, #tpu.memory_space<vmem>>, vector<8x1xf32>,
    } else {
    }
    %c0_i32_2 = arith.constant 0 : i32
    %6 = arith.cmpi ne, %arg1, %c0_i32_2 : i32
    %7 = arith.extui %6 : i1 to i32
    %c0_i32_3 = arith.constant 0 : i32
    %8 = arith.cmpi ne, %7, %c0_i32_3 : i32
    scf.if %8 {
      %c0_4 = arith.constant 0 : index
      %c0_5 = arith.constant 0 : index
      %9 = vector.load %arg3[%c0_4, %c0_5] : memref<8x1xf32, #tpu.memory_space<vmem>>, vector<8x1xf32>
      %10 = arith.maximumf %9, %2 : vector<8x1xf32>
      %c0_6 = arith.constant 0 : index
      %c0_7 = arith.constant 0 : index
      %11 = vector.load %arg3[%c0_6, %c0_7] : memref<8x1xf32, #tpu.memory_space<vmem>>, vector<8x1xf32>
      tpu.vector_store %arg3[%c0_6, %c0_7], %10 {strides = array<i32>} : memref<8x1xf32, #tpu.memory_space<vmem>>, vector<8x1xf32>,
    } else {
    }
    return
  }
  func.func @transform_0(%arg0: i32, %arg1: i32) -> (i32, i32) {
    %c0_i32 = arith.constant 0 : i32
    return %arg0, %arg1 : i32, i32
  }
  func.func @transform_1(%arg0: i32, %arg1: i32) -> (i32, i32) {
    %c0_i32 = arith.constant 0 : i32
    %c0_i32_0 = arith.constant 0 : i32
    return %arg0, %c0_i32 : i32, i32
  }
}

</mosaic_0001>

<llo_original>
// kernel: tpu_custom_call.1
$region0: #{tpu_custom_call.1}
  #allocation0 [shape = 'u32[]', space=smem, size = 0x4, offset = 0x4, fixed_abs, tag = 'smem constant byte address 0x4 - core index']
  #allocation1 [shape = 'u32[144,128]{1,0:T(1,128)}', space=vmem, size = 0x12000, scoped, tag = 'internal scratch']
  %s0 = inlined_call_operand.hbm [shape: f32[16,128], index: 0, kind: input, shape index: {}]
  %s1 = inlined_call_operand.vmem [shape: f32[16,1], index: 1, kind: output, shape index: {}]
  %s2 = sld [smem:[#allocation0]]
  $region49: #{tpu_custom_call.1} parent=0
    _
  %s4 = ssub.s32 1, %s2
  %s5 = scalar_select 0, %s4, %s2
  $region1: #{tpu_custom_call.1} parent=0
    #allocation2 [shape = 'u8[8192]{0}', space=vmem, size = 0x2000, scoped, tag = 'input window, operand 0']
    #allocation3 [shape = 's32[2]{0}', space=sflag, size = 0x8, scoped, tag = 'scoped memory for tpu_custom_call.1']
    %6 = vsyncpa [#allocation3], 0
    %s7 = scalar_lea.sflag [#allocation3], 1
    %8 = vsyncpa %s7, 0
    loop: start=0, step=1, limit=4
    $region2: #{tpu_custom_call.1} parent=1 // loop_pre_header
      _
    $region3: #{tpu_custom_call.1} parent=1 // loop_header
      %s10 = sphi 0, %s14
      %p11 = scmp.ge.s32.totalorder %s10, 4
      %s17 = sphi 0, %s29
      %s18 = sphi 0, %s25
      %s19 = sphi 0, %s17
      %s20 = sphi 0, %s18
      %s21 = sphi 0, %s19
      %s22 = sphi 0, %s20
      %s34 = sphi 0, %s36
      %s37 = sphi 0, %s34
      %s38 = sphi 0, %s37
      %s54 = sphi 0, %s38
      %s60 = sphi 0, %s62
      %s63 = sphi 0, %s60
      %s64 = sphi 0, %s63
      %s80 = sphi 0, %s64
    $region4: #{tpu_custom_call.1} parent=1 // loop_header_branch
      %13 = sbr.rel (%p11) target = $region8
    $region5: #{tpu_custom_call.1} parent=1 // loop_body
      %s15 = ssub.s32 %s10, 1
      %s16 = ssub.s32 %s10, 2
      %s23 = sadd.s32 1, %s18
      %p24 = scmp.ge.s32.totalorder %s23, 1
      %s25 = scalar_select %p24, 0, %s23
      %s26 = sadd.s32 1, %s17
      %s27 = scalar_select %p24, %s26, %s17
      %p28 = scmp.ge.s32.totalorder %s27, 2
      %s29 = scalar_select %p28, 0, %s27
      %s30 = ssub.s32 %s17, %s29
      %s31 = ssub.s32 %s18, %s25
      %s32 = sor.u32 %s30, %s31
      %p33 = scmp.eq.s32.totalorder %s32, 0
      %s35 = sadd.s32 %s34, 1
      %s36 = scalar_select %p33, %s34, %s35
      %p39 = pneg %p33
      %p40 = scmp.eq.s32.totalorder %s10, 1
      %p41 = por %p39, %p40
      %p42 = scmp.ne.s32.totalorder %s34, %s37
      %p43 = scmp.eq.s32.totalorder %s10, 0
      %p44 = por %p42, %p43
      %p45 = scmp.ne.s32.totalorder %s34, %s37
      %p46 = scmp.eq.s32.totalorder %s15, 1
      %p47 = por %p45, %p46
      %p48 = scmp.ne.s32.totalorder %s37, %s38
      %p49 = scmp.eq.s32.totalorder %s15, 0
      %p50 = por %p48, %p49
      %p51 = scmp.ne.s32.totalorder %s37, %s38
      %p52 = scmp.eq.s32.totalorder %s16, 1
      %p53 = por %p51, %p52
      %p55 = scmp.ne.s32.totalorder %s38, %s54
      %p56 = scmp.eq.s32.totalorder %s16, 0
      %p57 = por %p55, %p56
      %s58 = ssub.s32 %s17, %s29
      %p59 = scmp.eq.s32.totalorder %s58, 0
      %s61 = sadd.s32 %s60, 1
      %s62 = scalar_select %p59, %s60, %s61
      %p65 = pneg %p59
      %p66 = scmp.eq.s32.totalorder %s10, 1
      %p67 = por %p65, %p66
      %p68 = scmp.ne.s32.totalorder %s60, %s63
      %p69 = scmp.eq.s32.totalorder %s10, 0
      %p70 = por %p68, %p69
      %p71 = scmp.ne.s32.totalorder %s60, %s63
      %p72 = scmp.eq.s32.totalorder %s15, 1
      %p73 = por %p71, %p72
      %p74 = scmp.ne.s32.totalorder %s63, %s64
      %p75 = scmp.eq.s32.totalorder %s15, 0
      %p76 = por %p74, %p75
      %p77 = scmp.ne.s32.totalorder %s63, %s64
      %p78 = scmp.eq.s32.totalorder %s16, 1
      %p79 = por %p77, %p78
      %p81 = scmp.ne.s32.totalorder %s64, %s80
      %p82 = scmp.eq.s32.totalorder %s16, 0
      %p83 = por %p81, %p82
      %p84 = scmp.le.s32.totalorder 1, %s10
      %p85 = scmp.lt.s32.totalorder %s10, 3
      %p86 = pnand %p84, %p85
      %p87 = pneg %p86
      // Predicated region
      $region9: #{tpu_custom_call.1} parent=5 // pred_check
        _
      $region10: #{tpu_custom_call.1} parent=5 // pred_check_branch
        %89 = sbr.rel (%p86) target = $region12
      $region11: #{tpu_custom_call.1} parent=5 // pred_region
        %s90 = ssub.s32 %s10, 1
      $region12: #{tpu_custom_call.1} parent=5 // pred_fallthru
        _
      %p91 = scmp.lt.s32.totalorder %s10, 2
      // Predicated region
      $region13: #{tpu_custom_call.1} parent=5 // pred_check
        %p92 = pneg %p91
      $region14: #{tpu_custom_call.1} parent=5 // pred_check_branch
        %94 = sbr.rel (%p92) target = $region16
      $region15: #{tpu_custom_call.1} parent=5 // pred_region
        // Predicated region
        $region17: #{tpu_custom_call.1} parent=15 // pred_check
          %p95 = pneg %p44
        $region18: #{tpu_custom_call.1} parent=15 // pred_check_branch
          %97 = sbr.rel (%p95) target = $region20
        $region19: #{tpu_custom_call.1} parent=15 // pred_region
          %s98 = sand.u32 %s34, 1
          %s99 = scalar_lea.sflag [#allocation3], %s98
          %s100 = sand.u32 %s34, 1
          %s101 = smul.addr %s100, 8
          %s102 = scalar_lea.vmem [#allocation2], %s101
          %s104 = ssub.s32 128, 128
          %105 = vsyncadd %s99, %s104
          %s106 = sadd.s32 %s18, %s17
          %s107 = smul.addr %s106, 128
          %s108 = scalar_lea.hbm %s0, %s107
          %s110 = sshll.u32 %s102, 4
          %s111 = int_to_ptr.vmem [resolvable:$true] %s110
          %113 = dma.hbm_to_vmem [thread:$0]  %s108, 128, %s111, %s99
        $region20: #{tpu_custom_call.1} parent=15 // pred_fallthru
          _
      $region16: #{tpu_custom_call.1} parent=5 // pred_fallthru
        _
      %p114 = scmp.le.s32.totalorder 1, %s10
      %p115 = scmp.lt.s32.totalorder %s10, 3
      %p116 = pnand %p114, %p115
      %p117 = pneg %p116
      // Predicated region
      $region21: #{tpu_custom_call.1} parent=5 // pred_check
        _
      $region22: #{tpu_custom_call.1} parent=5 // pred_check_branch
        %119 = sbr.rel (%p116) target = $region24
      $region23: #{tpu_custom_call.1} parent=5 // pred_region
        %s120 = ssub.s32 %s10, 1
        %s121 = sand.u32 %s37, 1
        %s122 = scalar_lea.sflag [#allocation3], %s121
        %s123 = sand.u32 %s37, 1
        %s124 = smul.addr %s123, 8
        %s125 = scalar_lea.vmem [#allocation2], %s124
        // Predicated region
        $region25: #{tpu_custom_call.1} parent=23 // pred_check
          %p126 = pneg %p50
        $region26: #{tpu_custom_call.1} parent=23 // pred_check_branch
          %128 = sbr.rel (%p126) target = $region28
        $region27: #{tpu_custom_call.1} parent=23 // pred_region
          %129 = dma.done %s122, 128
        $region28: #{tpu_custom_call.1} parent=23 // pred_fallthru
          _
        %s130 = sand.u32 %s37, 1
        %s131 = scalar_lea.sflag [#allocation3], %s130
        %s132 = sand.u32 %s37, 1
        %s133 = smul.addr %s132, 8
        %s134 = scalar_lea.vmem [#allocation2], %s133
        %p135 = pneg %p50
        %p136 = pneg %p47
        %p137 = pneg %p76
        %p138 = pneg %p73
        %p139 = scmp.lt.s32.totalorder %s19, 1
        %s140 = scalar_select %p139, %s19, 1
        %s141 = smul.addr %s140, 8
        %s142 = scalar_lea.vmem %s1, %s141
        %p143 = scmp.lt.s32.totalorder %s19, 1
        %s144 = scalar_select %p143, %s19, 1
        %s145 = smul.addr %s144, 8
        %s146 = scalar_lea.vmem %s1, %s145
        %v147 = vld [vmem:[%s125] sm:$0xff]
        %148 = vmax.xlane.f32.xlu0 %v147
        %v149 = vpop.xlane.xlu0 %148
        %p150 = scmp.eq.s32.totalorder %s20, 0
        // Predicated region
        $region29: #{tpu_custom_call.1} parent=23 // pred_check
          %p151 = pneg %p150
        $region30: #{tpu_custom_call.1} parent=23 // pred_check_branch
          %153 = sbr.rel (%p151) target = $region32
        $region31: #{tpu_custom_call.1} parent=23 // pred_region
          %vm154 = vcmask 7168
          %155 = vst.msk [vmem:[%s146] sm:$0xff] %vm154, %v149
        $region32: #{tpu_custom_call.1} parent=23 // pred_fallthru
          _
        %p156 = scmp.ne.s32.totalorder %s20, 0
        // Predicated region
        $region33: #{tpu_custom_call.1} parent=23 // pred_check
          %p157 = pneg %p156
        $region34: #{tpu_custom_call.1} parent=23 // pred_check_branch
          %159 = sbr.rel (%p157) target = $region36
        $region35: #{tpu_custom_call.1} parent=23 // pred_region
          %v160 = vld [vmem:[%s146] sm:$0xff]
          %v161 = vmax.f32 %v160, %v149
          %vm162 = vcmask 7168
          %163 = vst.msk [vmem:[%s146] sm:$0xff] %vm162, %v161
        $region36: #{tpu_custom_call.1} parent=23 // pred_fallthru
          _
        %p164 = scmp.lt.s32.totalorder %s19, 1
        %s165 = scalar_select %p164, %s19, 1
        %s166 = smul.addr %s165, 8
        %s167 = scalar_lea.vmem %s1, %s166
        // Predicated region
        $region37: #{tpu_custom_call.1} parent=23 // pred_check
          %p168 = pneg %p73
        $region38: #{tpu_custom_call.1} parent=23 // pred_check_branch
          %170 = sbr.rel (%p168) target = $region40
        $region39: #{tpu_custom_call.1} parent=23 // pred_region
          _
        $region40: #{tpu_custom_call.1} parent=23 // pred_fallthru
          _
      $region24: #{tpu_custom_call.1} parent=5 // pred_fallthru
        _
      %p171 = scmp.le.s32.totalorder 2, %s10
      // Predicated region
      $region41: #{tpu_custom_call.1} parent=5 // pred_check
        %p172 = pneg %p171
      $region42: #{tpu_custom_call.1} parent=5 // pred_check_branch
        %174 = sbr.rel (%p172) target = $region44
      $region43: #{tpu_custom_call.1} parent=5 // pred_region
        %s175 = ssub.s32 %s10, 2
        // Predicated region
        $region45: #{tpu_custom_call.1} parent=43 // pred_check
          %p176 = pneg %p79
        $region46: #{tpu_custom_call.1} parent=43 // pred_check_branch
          %178 = sbr.rel (%p176) target = $region48
        $region47: #{tpu_custom_call.1} parent=43 // pred_region
          %p179 = scmp.lt.s32.totalorder %s21, 1
          %s180 = scalar_select %p179, %s21, 1
          %s181 = smul.addr %s180, 8
          %s182 = scalar_lea.vmem %s1, %s181
        $region48: #{tpu_custom_call.1} parent=43 // pred_fallthru
          _
      $region44: #{tpu_custom_call.1} parent=5 // pred_fallthru
        _
    $region6: #{tpu_custom_call.1} parent=1 // loop_footer
      %s14 = sadd.s32 1, %s10
    $region7: #{tpu_custom_call.1} parent=1 // loop_footer_branch
      %9 = sbr.rel target = $region3
    $region8: #{tpu_custom_call.1} parent=1 // loop_exit
      _
    %183 = vsyncpa [#allocation3], 1
    %s184 = scalar_lea.sflag [#allocation3], 1
    %185 = vsyncpa %s184, 1

</llo_original>
